<compile_context>
chip_gen: v6e
topology: v6e:2x2x1
jax: 0.10.0
libtpu: 0.0.40
codegen_flags: <defaults>
</compile_context>

<pallas_src>
import functools

import jax
import jax.numpy as jnp
from jax import lax
from jax.experimental import pallas as pl
from jax.experimental.pallas import tpu as pltpu


_TARGET_TILE_BYTES = 4 << 20  # ~4 MiB vals tile (x2 for double buffering)


def _choose_tiles(bs, n, c, itemsize):
    """Pick (tb, tn, num_k); ceil-div grid over n, no host-side padding."""
    row_bytes = max(1, c * itemsize)
    if n * row_bytes <= _TARGET_TILE_BYTES:
        tn = n                                    # full dim -> always legal
    else:
        tn = max(128, (_TARGET_TILE_BYTES // row_bytes) // 128 * 128)
    num_k = -(-n // tn)

    # Pack batch rows per grid step to amortize ~0.35us/step overhead, but keep
    # grid[0] >= 2 whenever bs >= 2 so both v7x TensorCores get work.
    cap = max(1, _TARGET_TILE_BYTES // (tn * row_bytes))
    if bs >= 2:
        cap = min(cap, bs // 2)
    tb = 1
    for d in range(1, bs + 1):
        if bs % d == 0 and d <= cap:
            tb = d
    return tb, tn, num_k


def _pool_kernel(*refs, has_mask, mean, tn, kps, n_valid, mask_tail, vals_tail,
                 compute_dtype, precision):
    if has_mask:
        vals_ref, mask_ref = refs[0], refs[1]
        outs = refs[2:]
    else:
        vals_ref, mask_ref = refs[0], None
        outs = refs[1:]
    sum_ref = outs[0]
    cnt_ref = outs[1] if mean else None

    k = pl.program_id(2)

    @pl.when(k == 0)
    def _init():
        sum_ref[...] = jnp.zeros_like(sum_ref)
        if mean:
            cnt_ref[...] = jnp.zeros_like(cnt_ref)

    tb = vals_ref.shape[0]
    start = (pl.program_id(1) * kps + k) * tn     # unclamped global row offset

    # Mask row (tb, 1, tn) in the MXU compute dtype; {0,1} values stay exact.
    if has_mask:
        m = mask_ref[...].astype(compute_dtype)
    else:
        m = jnp.ones((tb, 1, tn), dtype=compute_dtype)
    if mask_tail:
        lane = lax.broadcasted_iota(jnp.int32, (1, 1, tn), 2)
        m = jnp.where(lane + start < n_valid, m, jnp.zeros_like(m))

    vals = vals_ref[...]
    if vals_tail:
        # The last real tile reads stale VMEM past n; zero those rows so the
        # 0-mask * garbage product can never produce NaN/Inf.
        row = lax.broadcasted_iota(jnp.int32, (1, tn, 1), 1)
        vals = jnp.where(row + start < n_valid, vals, jnp.zeros_like(vals))
    vals = vals.astype(compute_dtype)

    # Masked sum over n == batched matvec on the MXU, f32 accumulation.
    sum_ref[...] += lax.dot_general(
        m, vals,
        dimension_numbers=(((2,), (1,)), ((0,), (0,))),
        preferred_element_type=jnp.float32,
        precision=precision)

    if mean:
        cnt_ref[...] += jnp.sum(m.astype(jnp.float32), axis=-1, keepdims=True)


def _pool_call(vals, mask, *, mean=False, divisor=None):
    bs, n, c = vals.shape
    itemsize = jnp.dtype(vals.dtype).itemsize
    tb, tn, num_k = _choose_tiles(bs, n, c, itemsize)

    # Split the n-reduction across a size-2 parallel axis when the batch axis
    # can't occupy both v7x cores (only happens for bs == 1).
    n_splits = 2 if (bs // tb == 1 and num_k >= 2) else 1
    assert n_splits == 1 or (bs == 1 and tb == 1)
    kps = -(-num_k // n_splits)                  # k tiles per split
    need_clamp = (n_splits * kps != num_k)
    mask_tail = (n_splits * kps * tn != n)       # any virtual position >= n
    vals_tail = (n % tn != 0)                    # last real tile overhangs n

    compute_dtype = jnp.bfloat16 if vals.dtype == jnp.bfloat16 else jnp.float32
    precision = (lax.Precision.HIGHEST
                 if compute_dtype == jnp.float32 else None)

    last_tile = num_k - 1
    if need_clamp:
        def k_idx(s, k):
            return jnp.minimum(s * kps + k, last_tile)
    else:
        def k_idx(s, k):
            return s * kps + k

    in_specs = [pl.BlockSpec((tb, tn, c), lambda b, s, k: (b, k_idx(s, k), 0))]
    operands = [vals]
    has_mask = mask is not None
    if has_mask:
        in_specs.append(
            pl.BlockSpec((tb, 1, tn), lambda b, s, k: (b, 0, k_idx(s, k))))
        operands.append(mask.astype(jnp.int8).reshape(bs, 1, n))

    parts = bs * n_splits
    sum_spec = pl.BlockSpec((tb, 1, c), lambda b, s, k: (b * n_splits + s, 0, 0))
    if mean:
        out_shape = (jax.ShapeDtypeStruct((parts, 1, c), jnp.float32),
                     jax.ShapeDtypeStruct((parts, 1, 1), jnp.float32))
        out_specs = (sum_spec,
                     pl.BlockSpec((tb, 1, 1),
                                  lambda b, s, k: (b * n_splits + s, 0, 0)))
    else:
        out_shape = jax.ShapeDtypeStruct((parts, 1, c), jnp.float32)
        out_specs = sum_spec

    kernel = functools.partial(
        _pool_kernel, has_mask=has_mask, mean=mean, tn=tn, kps=kps, n_valid=n,
        mask_tail=mask_tail, vals_tail=vals_tail, compute_dtype=compute_dtype,
        precision=precision)

    result = pl.pallas_call(
        kernel,
        out_shape=out_shape,
        grid=(bs // tb, n_splits, kps),
        in_specs=in_specs,
        out_specs=out_specs,
        compiler_params=pltpu.CompilerParams(
            dimension_semantics=("parallel", "parallel", "arbitrary")),
    )(*operands)

    if mean:
        sums, cnts = result
        summed = sums.reshape(bs, n_splits, c).sum(axis=1)
        count = cnts.reshape(bs, n_splits).sum(axis=1)
        summed = summed / count[:, None]     # all-False row -> 0/0 = NaN (== torch)
    else:
        summed = result.reshape(bs, n_splits, c).sum(axis=1)
        if divisor is not None:
            summed = summed / divisor
    return summed.astype(vals.dtype)


def global_pool(x, mean=False):
    """x = [coords (bs,n,d), vals (bs,n,c), mask (bs,n)]  or  [_, vals]."""
    if len(x) == 2:
        vals = x[1]
        return _pool_call(vals, None, divisor=float(vals.shape[1]))  # x[1].mean(1)
    _coords, vals, mask = x                       # coords are unused by the op
    return _pool_call(vals, mask, mean=mean)


if __name__ == "__main__":
    key = jax.random.PRNGKey(0)
    keys = jax.random.split(key, 9)

    def ref_pool(v, m, mean):
        s = jnp.sum(jnp.where(m[..., None], v.astype(jnp.float32), 0.0), axis=1)
        if mean:
            s = s / jnp.sum(m, axis=-1, keepdims=True).astype(jnp.float32)
        return s

    # --- 1) small shapes: single n-tile, f32 masked sum / mean / 2-arg ------
    bs, n, d, c = 2, 8, 3, 32
    coords = jax.random.normal(keys[0], (bs, n, d), jnp.float32)
    vals = jax.random.normal(keys[1], (bs, n, c), jnp.float32)
    mask = jax.random.bernoulli(keys[2], 0.7, (bs, n)).at[:, 0].set(True)

    out_sum = jax.block_until_ready(global_pool([coords, vals, mask], mean=False))
    assert out_sum.shape == (bs, c)
    assert jnp.allclose(out_sum, ref_pool(vals, mask, False), atol=1e-5, rtol=1e-5)

    out_mean = jax.block_until_ready(global_pool([coords, vals, mask], mean=True))
    assert jnp.allclose(out_mean, ref_pool(vals, mask, True), atol=1e-5, rtol=1e-5)

    out_2 = jax.block_until_ready(global_pool([coords, vals]))
    assert jnp.allclose(out_2, jnp.mean(vals, axis=1), atol=1e-5, rtol=1e-5)

    # --- 2) bf16 vals: bf16 MXU path with f32 accumulation ------------------
    vb = jax.random.normal(keys[3], (2, 256, 128), jnp.float32).astype(jnp.bfloat16)
    mb = jax.random.bernoulli(keys[4], 0.5, (2, 256)).at[:, 0].set(True)
    ob = jax.block_until_ready(global_pool([None, vb, mb], mean=True))
    assert ob.dtype == jnp.bfloat16
    assert jnp.allclose(ob.astype(jnp.float32), ref_pool(vb, mb, True),
                        atol=1e-1, rtol=2e-2)

    # --- 3) tiled + ragged tail, no host padding: n=2500 -> TN=2048, 2 k-steps
    v3 = jax.random.normal(keys[5], (2, 2500, 512), jnp.float32)
    v3 = v3.astype(jnp.bfloat16).astype(jnp.float32)   # exactly representable
    m3 = jax.random.bernoulli(keys[6], 0.5, (2, 2500)).at[:, 0].set(True)
    o3s = jax.block_until_ready(global_pool([None, v3, m3], mean=False))
    o3m = jax.block_until_ready(global_pool([None, v3, m3], mean=True))
    assert jnp.allclose(o3s, ref_pool(v3, m3, False), atol=1e-3, rtol=1e-4)
    assert jnp.allclose(o3m, ref_pool(v3, m3, True), atol=1e-4, rtol=1e-4)

    # --- 4) bs == 1: n-range split across a size-2 parallel axis (+ clamp) --
    v4 = jax.random.normal(keys[7], (1, 5000, 512), jnp.float32)
    v4 = v4.astype(jnp.bfloat16).astype(jnp.float32)
    m4 = jax.random.bernoulli(keys[8], 0.5, (1, 5000)).at[:, 0].set(True)
    o4s = jax.block_until_ready(global_pool([None, v4, m4], mean=False))
    o4m = jax.block_until_ready(global_pool([None, v4, m4], mean=True))
    assert jnp.allclose(o4s, ref_pool(v4, m4, False), atol=2e-3, rtol=1e-4)
    assert jnp.allclose(o4m, ref_pool(v4, m4, True), atol=1e-4, rtol=1e-4)

    print("KERNEL_OK")
</pallas_src>

<mosaic_0001>
module attributes {stable_mosaic.version = 11 : i64} {
  func.func @_pool_kernel(%arg0: i32, %arg1: i32, %arg2: i32, %arg3: memref<1x8x32xf32, #tpu.memory_space<vmem>>, %arg4: memref<1x1x8xi8, #tpu.memory_space<vmem>>, %arg5: memref<1x1x32xf32, #tpu.memory_space<vmem>>) attributes {dimension_semantics = [#tpu.dimension_semantics<parallel>, #tpu.dimension_semantics<parallel>, #tpu.dimension_semantics<arbitrary>], iteration_bounds = array<i64: 2, 1, 1>, scalar_prefetch = 0 : i64, scratch_operands = 0 : i64, tpu.core_type = #tpu.core_type<tc>, window_params = [{transform_indices = @transform_0, window_bounds = array<i64: 1, 8, 32>}, {transform_indices = @transform_1, window_bounds = array<i64: 1, 1, 8>}, {transform_indices = @transform_2, window_bounds = array<i64: 1, 1, 32>}]} {
    %c0_i32 = arith.constant 0 : i32
    %0 = arith.cmpi eq, %arg2, %c0_i32 : i32
    %1 = arith.extui %0 : i1 to i32
    %c0_i32_0 = arith.constant 0 : i32
    %2 = arith.cmpi ne, %1, %c0_i32_0 : i32
    scf.if %2 {
      %cst_12 = arith.constant 0.000000e+00 : f32
      %10 = vector.broadcast %cst_12 : f32 to vector<1x1x32xf32>
      %c0_13 = arith.constant 0 : index
      %c0_14 = arith.constant 0 : index
      %c0_15 = arith.constant 0 : index
      %11 = vector.load %arg5[%c0_13, %c0_14, %c0_15] : memref<1x1x32xf32, #tpu.memory_space<vmem>>, vector<1x1x32xf32>
      tpu.vector_store %arg5[%c0_13, %c0_14, %c0_15], %10 {strides = array<i32>} : memref<1x1x32xf32, #tpu.memory_space<vmem>>, vector<1x1x32xf32>,
    } else {
    }
    %c0 = arith.constant 0 : index
    %c0_1 = arith.constant 0 : index
    %c0_2 = arith.constant 0 : index
    %3 = vector.load %arg4[%c0, %c0_1, %c0_2] : memref<1x1x8xi8, #tpu.memory_space<vmem>>, vector<1x1x8xi8>
    %4 = arith.sitofp %3 : vector<1x1x8xi8> to vector<1x1x8xf32>
    %c0_3 = arith.constant 0 : index
    %c0_4 = arith.constant 0 : index
    %c0_5 = arith.constant 0 : index
    %5 = vector.load %arg3[%c0_3, %c0_4, %c0_5] : memref<1x8x32xf32, #tpu.memory_space<vmem>>, vector<1x8x32xf32>
    %c0_6 = arith.constant 0 : index
    %c0_7 = arith.constant 0 : index
    %c0_8 = arith.constant 0 : index
    %6 = vector.load %arg5[%c0_6, %c0_7, %c0_8] : memref<1x1x32xf32, #tpu.memory_space<vmem>>, vector<1x1x32xf32>
    %cst = arith.constant dense<0.000000e+00> : vector<1x1x32xf32>
    %7 = tpu.matmul %4, %5, %cst {dimension_numbers = #tpu.dot_dimension_numbers<[2], [1], [1], [2], [0, 0, 0, 1, 1, 2], [0], [0]>, precision = #tpu.contract_precision<fp32>} : vector<1x1x8xf32>, vector<1x8x32xf32>, vector<1x1x32xf32> -> vector<1x1x32xf32>
    %8 = arith.addf %6, %7 : vector<1x1x32xf32>
    %c0_9 = arith.constant 0 : index
    %c0_10 = arith.constant 0 : index
    %c0_11 = arith.constant 0 : index
    %9 = vector.load %arg5[%c0_9, %c0_10, %c0_11] : memref<1x1x32xf32, #tpu.memory_space<vmem>>, vector<1x1x32xf32>
    tpu.vector_store %arg5[%c0_9, %c0_10, %c0_11], %8 {strides = array<i32>} : memref<1x1x32xf32, #tpu.memory_space<vmem>>, vector<1x1x32xf32>,
    return
  }
  func.func @transform_0(%arg0: i32, %arg1: i32, %arg2: i32) -> (i32, i32, i32) {
    %c1_i32 = arith.constant 1 : i32
    %0 = arith.muli %arg1, %c1_i32 : i32
    %1 = arith.addi %0, %arg2 : i32
    %c0_i32 = arith.constant 0 : i32
    %c0_i32_0 = arith.constant 0 : i32
    return %arg0, %1, %c0_i32 : i32, i32, i32
  }
  func.func @transform_1(%arg0: i32, %arg1: i32, %arg2: i32) -> (i32, i32, i32) {
    %c1_i32 = arith.constant 1 : i32
    %0 = arith.muli %arg1, %c1_i32 : i32
    %1 = arith.addi %0, %arg2 : i32
    %c0_i32 = arith.constant 0 : i32
    %c0_i32_0 = arith.constant 0 : i32
    return %arg0, %c0_i32, %1 : i32, i32, i32
  }
  func.func @transform_2(%arg0: i32, %arg1: i32, %arg2: i32) -> (i32, i32, i32) {
    %c1_i32 = arith.constant 1 : i32
    %0 = arith.muli %arg0, %c1_i32 : i32
    %1 = arith.addi %0, %arg1 : i32
    %c0_i32 = arith.constant 0 : i32
    %c0_i32_0 = arith.constant 0 : i32
    %c0_i32_1 = arith.constant 0 : i32
    return %1, %c0_i32, %c0_i32_0 : i32, i32, i32
  }
}

</mosaic_0001>

<llo_original>
// kernel: tpu_custom_call.1
$region0: #{tpu_custom_call.1}
  #allocation0 [shape = 'u32[]', space=smem, size = 0x4, offset = 0x4, fixed_abs, tag = 'smem constant byte address 0x4 - core index']
  #allocation1 [shape = 'u32[144,128]{1,0:T(1,128)}', space=vmem, size = 0x12000, scoped, tag = 'internal scratch']
  %s0 = inlined_call_operand.hbm [shape: f32[2,8,32], index: 0, kind: input, shape index: {}]
  %s1 = inlined_call_operand.vmem [shape: s8[2,1,8], index: 1, kind: input, shape index: {}]
  %s2 = inlined_call_operand.hbm [shape: f32[2,1,32], index: 2, kind: output, shape index: {}]
  %s3 = sld [smem:[#allocation0]]
  $region49: #{tpu_custom_call.1} parent=0
    _
  %s5 = ssub.s32 1, %s3
  %s6 = scalar_select 0, %s5, %s3
  $region1: #{tpu_custom_call.1} parent=0
    #allocation2 [shape = 'u8[8192]{0}', space=vmem, size = 0x2000, scoped, tag = 'input window, operand 0']
    #allocation3 [shape = 's32[2]{0}', space=sflag, size = 0x8, scoped, tag = 'scoped memory for tpu_custom_call.1']
    #allocation4 [shape = 's32[2]{0}', space=sflag, size = 0x8, scoped, tag = 'scoped memory for tpu_custom_call.1']
    #allocation5 [shape = 'u8[1024]{0}', space=vmem, size = 0x400, scoped, tag = 'output window, operand 0']
    %7 = vsyncpa [#allocation3], 0
    %s8 = scalar_lea.sflag [#allocation3], 1
    %9 = vsyncpa %s8, 0
    %10 = vsyncpa [#allocation4], 0
    %s11 = scalar_lea.sflag [#allocation4], 1
    %12 = vsyncpa %s11, 0
    loop: start=0, step=1, limit=4
    $region2: #{tpu_custom_call.1} parent=1 // loop_pre_header
      _
    $region3: #{tpu_custom_call.1} parent=1 // loop_header
      %s14 = sphi 0, %s18
      %p15 = scmp.ge.s32.totalorder %s14, 4
      %s21 = sphi 0, %s40
      %s22 = sphi 0, %s36
      %s23 = sphi 0, %s32
      %s24 = sphi 0, %s21
      %s25 = sphi 0, %s22
      %s26 = sphi 0, %s23
      %s27 = sphi 0, %s24
      %s28 = sphi 0, %s25
      %s29 = sphi 0, %s26
      %s47 = sphi 0, %s49
      %s50 = sphi 0, %s47
      %s51 = sphi 0, %s50
      %s67 = sphi 0, %s51
      %s77 = sphi 0, %s79
      %s80 = sphi 0, %s77
      %s81 = sphi 0, %s80
      %s97 = sphi 0, %s81
      %s105 = sphi 0, %s107
      %s108 = sphi 0, %s105
      %s109 = sphi 0, %s108
      %s125 = sphi 0, %s109
    $region4: #{tpu_custom_call.1} parent=1 // loop_header_branch
      %17 = sbr.rel (%p15) target = $region8
    $region5: #{tpu_custom_call.1} parent=1 // loop_body
      %s19 = ssub.s32 %s14, 1
      %s20 = ssub.s32 %s14, 2
      %s30 = sadd.s32 1, %s23
      %p31 = scmp.ge.s32.totalorder %s30, 1
      %s32 = scalar_select %p31, 0, %s30
      %s33 = sadd.s32 1, %s22
      %s34 = scalar_select %p31, %s33, %s22
      %p35 = scmp.ge.s32.totalorder %s34, 1
      %s36 = scalar_select %p35, 0, %s34
      %s37 = sadd.s32 1, %s21
      %s38 = scalar_select %p35, %s37, %s21
      %p39 = scmp.ge.s32.totalorder %s38, 2
      %s40 = scalar_select %p39, 0, %s38
      %s41 = sadd.s32 %s22, %s23
      %s42 = sadd.s32 %s36, %s32
      %s43 = ssub.s32 %s21, %s40
      %s44 = ssub.s32 %s41, %s42
      %s45 = sor.u32 %s43, %s44
      %p46 = scmp.eq.s32.totalorder %s45, 0
      %s48 = sadd.s32 %s47, 1
      %s49 = scalar_select %p46, %s47, %s48
      %p52 = pneg %p46
      %p53 = scmp.eq.s32.totalorder %s14, 1
      %p54 = por %p52, %p53
      %p55 = scmp.ne.s32.totalorder %s47, %s50
      %p56 = scmp.eq.s32.totalorder %s14, 0
      %p57 = por %p55, %p56
      %p58 = scmp.ne.s32.totalorder %s47, %s50
      %p59 = scmp.eq.s32.totalorder %s19, 1
      %p60 = por %p58, %p59
      %p61 = scmp.ne.s32.totalorder %s50, %s51
      %p62 = scmp.eq.s32.totalorder %s19, 0
      %p63 = por %p61, %p62
      %p64 = scmp.ne.s32.totalorder %s50, %s51
      %p65 = scmp.eq.s32.totalorder %s20, 1
      %p66 = por %p64, %p65
      %p68 = scmp.ne.s32.totalorder %s51, %s67
      %p69 = scmp.eq.s32.totalorder %s20, 0
      %p70 = por %p68, %p69
      %s71 = sadd.s32 %s22, %s23
      %s72 = sadd.s32 %s36, %s32
      %s73 = ssub.s32 %s21, %s40
      %s74 = ssub.s32 %s71, %s72
      %s75 = sor.u32 %s73, %s74
      %p76 = scmp.eq.s32.totalorder %s75, 0
      %s78 = sadd.s32 %s77, 1
      %s79 = scalar_select %p76, %s77, %s78
      %p82 = pneg %p76
      %p83 = scmp.eq.s32.totalorder %s14, 1
      %p84 = por %p82, %p83
      %p85 = scmp.ne.s32.totalorder %s77, %s80
      %p86 = scmp.eq.s32.totalorder %s14, 0
      %p87 = por %p85, %p86
      %p88 = scmp.ne.s32.totalorder %s77, %s80
      %p89 = scmp.eq.s32.totalorder %s19, 1
      %p90 = por %p88, %p89
      %p91 = scmp.ne.s32.totalorder %s80, %s81
      %p92 = scmp.eq.s32.totalorder %s19, 0
      %p93 = por %p91, %p92
      %p94 = scmp.ne.s32.totalorder %s80, %s81
      %p95 = scmp.eq.s32.totalorder %s20, 1
      %p96 = por %p94, %p95
      %p98 = scmp.ne.s32.totalorder %s81, %s97
      %p99 = scmp.eq.s32.totalorder %s20, 0
      %p100 = por %p98, %p99
      %s101 = sadd.s32 %s21, %s22
      %s102 = sadd.s32 %s40, %s36
      %s103 = ssub.s32 %s101, %s102
      %p104 = scmp.eq.s32.totalorder %s103, 0
      %s106 = sadd.s32 %s105, 1
      %s107 = scalar_select %p104, %s105, %s106
      %p110 = pneg %p104
      %p111 = scmp.eq.s32.totalorder %s14, 1
      %p112 = por %p110, %p111
      %p113 = scmp.ne.s32.totalorder %s105, %s108
      %p114 = scmp.eq.s32.totalorder %s14, 0
      %p115 = por %p113, %p114
      %p116 = scmp.ne.s32.totalorder %s105, %s108
      %p117 = scmp.eq.s32.totalorder %s19, 1
      %p118 = por %p116, %p117
      %p119 = scmp.ne.s32.totalorder %s108, %s109
      %p120 = scmp.eq.s32.totalorder %s19, 0
      %p121 = por %p119, %p120
      %p122 = scmp.ne.s32.totalorder %s108, %s109
      %p123 = scmp.eq.s32.totalorder %s20, 1
      %p124 = por %p122, %p123
      %p126 = scmp.ne.s32.totalorder %s109, %s125
      %p127 = scmp.eq.s32.totalorder %s20, 0
      %p128 = por %p126, %p127
      %p129 = scmp.le.s32.totalorder 1, %s14
      %p130 = scmp.lt.s32.totalorder %s14, 3
      %p131 = pnand %p129, %p130
      %p132 = pneg %p131
      // Predicated region
      $region9: #{tpu_custom_call.1} parent=5 // pred_check
        _
      $region10: #{tpu_custom_call.1} parent=5 // pred_check_branch
        %134 = sbr.rel (%p131) target = $region12
      $region11: #{tpu_custom_call.1} parent=5 // pred_region
        %s135 = ssub.s32 %s14, 1
      $region12: #{tpu_custom_call.1} parent=5 // pred_fallthru
        _
      %p136 = scmp.lt.s32.totalorder %s14, 2
      // Predicated region
      $region13: #{tpu_custom_call.1} parent=5 // pred_check
        %p137 = pneg %p136
      $region14: #{tpu_custom_call.1} parent=5 // pred_check_branch
        %139 = sbr.rel (%p137) target = $region16
      $region15: #{tpu_custom_call.1} parent=5 // pred_region
        // Predicated region
        $region17: #{tpu_custom_call.1} parent=15 // pred_check
          %p140 = pneg %p57
        $region18: #{tpu_custom_call.1} parent=15 // pred_check_branch
          %142 = sbr.rel (%p140) target = $region20
        $region19: #{tpu_custom_call.1} parent=15 // pred_region
          %s143 = sand.u32 %s47, 1
          %s144 = scalar_lea.sflag [#allocation3], %s143
          %s145 = sand.u32 %s47, 1
          %s146 = smul.addr %s145, 8
          %s147 = scalar_lea.vmem [#allocation2], %s146
          %s148 = sadd.s32 %s22, %s23
          %s150 = ssub.s32 128, 128
          %151 = vsyncadd %s144, %s150
          %s152 = sadd.s32 %s148, %s21
          %s153 = smul.addr %s152, 128
          %s154 = scalar_lea.hbm %s0, %s153
          %s156 = sshll.u32 %s147, 4
          %s157 = int_to_ptr.vmem [resolvable:$true] %s156
          %159 = dma.hbm_to_vmem [thread:$0]  %s154, 128, %s157, %s144
        $region20: #{tpu_custom_call.1} parent=15 // pred_fallthru
          _
        // Predicated region
        $region21: #{tpu_custom_call.1} parent=15 // pred_check
          %p160 = pneg %p87
        $region22: #{tpu_custom_call.1} parent=15 // pred_check_branch
          %162 = sbr.rel (%p160) target = $region24
        $region23: #{tpu_custom_call.1} parent=15 // pred_region
          %s163 = sadd.s32 %s22, %s23
          %p164 = scmp.lt.s32.totalorder %s21, 1
          %s165 = scalar_select %p164, %s21, 1
          %p166 = scmp.lt.s32.totalorder %s163, 0
          %s167 = scalar_select %p166, %s163, 0
          %s168 = sadd.s32 %s167, %s165
          %s169 = scalar_lea.vmem %s1, %s168
          %s170 = sadd.s32 %s22, %s23
        $region24: #{tpu_custom_call.1} parent=15 // pred_fallthru
          _
      $region16: #{tpu_custom_call.1} parent=5 // pred_fallthru
        _
      %p171 = scmp.le.s32.totalorder 1, %s14
      %p172 = scmp.lt.s32.totalorder %s14, 3
      %p173 = pnand %p171, %p172
      %p174 = pneg %p173
      // Predicated region
      $region25: #{tpu_custom_call.1} parent=5 // pred_check
        _
      $region26: #{tpu_custom_call.1} parent=5 // pred_check_branch
        %176 = sbr.rel (%p173) target = $region28
      $region27: #{tpu_custom_call.1} parent=5 // pred_region
        %s177 = ssub.s32 %s14, 1
        %s178 = sand.u32 %s50, 1
        %s179 = scalar_lea.sflag [#allocation3], %s178
        %s180 = sand.u32 %s50, 1
        %s181 = smul.addr %s180, 8
        %s182 = scalar_lea.vmem [#allocation2], %s181
        // Predicated region
        $region29: #{tpu_custom_call.1} parent=27 // pred_check
          %p183 = pneg %p63
        $region30: #{tpu_custom_call.1} parent=27 // pred_check_branch
          %185 = sbr.rel (%p183) target = $region32
        $region31: #{tpu_custom_call.1} parent=27 // pred_region
          %186 = dma.done %s179, 128
        $region32: #{tpu_custom_call.1} parent=27 // pred_fallthru
          _
        %s187 = sand.u32 %s50, 1
        %s188 = scalar_lea.sflag [#allocation3], %s187
        %s189 = sand.u32 %s50, 1
        %s190 = smul.addr %s189, 8
        %s191 = scalar_lea.vmem [#allocation2], %s190
        %p192 = pneg %p63
        %p193 = pneg %p60
        %s194 = sadd.s32 %s25, %s26
        %p195 = scmp.lt.s32.totalorder %s24, 1
        %s196 = scalar_select %p195, %s24, 1
        %p197 = scmp.lt.s32.totalorder %s194, 0
        %s198 = scalar_select %p197, %s194, 0
        %s199 = sadd.s32 %s198, %s196
        %s200 = scalar_lea.vmem %s1, %s199
        %p201 = pneg %p93
        %p202 = pneg %p90
        %p203 = pneg %p121
        %p204 = pneg %p118
        %s205 = sand.u32 %s108, 1
        %s206 = scalar_lea.sflag [#allocation4], %s205
        %s207 = sand.u32 %s108, 1
        %s208 = scalar_lea.vmem [#allocation5], %s207
        %s209 = sadd.s32 %s25, %s26
        %s210 = sadd.s32 %s25, %s26
        %p211 = scmp.lt.s32.totalorder %s24, 1
        %s212 = scalar_select %p211, %s24, 1
        %p213 = scmp.lt.s32.totalorder %s210, 0
        %s214 = scalar_select %p213, %s210, 0
        %s215 = sadd.s32 %s214, %s212
        %s216 = scalar_lea.vmem %s1, %s215
        %s217 = sadd.s32 %s25, %s26
        %s218 = sadd.s32 %s24, %s25
        %p219 = scmp.eq.s32.totalorder %s26, 0
        // Predicated region
        $region33: #{tpu_custom_call.1} parent=27 // pred_check
          %p220 = pneg %p219
        $region34: #{tpu_custom_call.1} parent=27 // pred_check_branch
          %222 = sbr.rel (%p220) target = $region36
        $region35: #{tpu_custom_call.1} parent=27 // pred_region
          %vm223 = vcmask 253952
          %224 = vst.msk [vmem:[%s208] sm:$0x1] %vm223, 0.0
        $region36: #{tpu_custom_call.1} parent=27 // pred_fallthru
          _
        %v225 = vld [vmem:[%s216] sm:$0x1]
        %v226 = vunpack.c.0.s8 %v225
        %v227 = vcvt.s32.f32 %v226
        %v228 = vld [vmem:[%s182] sm:$0xff]
        %v229 = vld [vmem:[%s208] sm:$0x1]
        %vm230 = vcmask 64512
        %v232 = vsel %vm230, %v227, 0
        %234 = vmatprep.subr.mxu0 0.0
        %235 = vmatpush1.msra.mxu0 0.0
        %236 = vmatprep.subr.mxu0 0.0
        %237 = vmatpush1.msra.mxu0 0.0
        %238 = vmatprep.subr.mxu0 0.0
        %239 = vmatpush1.msra.mxu0 0.0
        %240 = vmatprep.subr.mxu0 0.0
        %241 = vmatpush1.msra.mxu0 0.0
        %242 = vmatprep.subr.mxu0 0.0
        %243 = vmatpush1.msra.mxu0 0.0
        %244 = vmatprep.subr.mxu0 0.0
        %245 = vmatpush1.msra.mxu0 0.0
        %246 = vmatprep.subr.mxu0 0.0
        %247 = vmatpush1.msra.mxu0 0.0
        %248 = vmatprep.subr.mxu0 0.0
        %249 = vmatpush1.msra.mxu0 0.0
        %250 = vmatprep.subr.mxu0 0.0
        %251 = vmatpush1.msra.mxu0 0.0
        %252 = vmatprep.subr.mxu0 0.0
        %253 = vmatpush1.msra.mxu0 0.0
        %254 = vmatprep.subr.mxu0 0.0
        %255 = vmatpush1.msra.mxu0 0.0
        %256 = vmatprep.subr.mxu0 0.0
        %257 = vmatpush1.msra.mxu0 0.0
        %258 = vmatprep.subr.mxu0 0.0
        %259 = vmatpush1.msra.mxu0 0.0
        %260 = vmatprep.subr.mxu0 0.0
        %261 = vmatpush1.msra.mxu0 0.0
        %262 = vmatprep.subr.mxu0 0.0
        %263 = vmatpush1.msra.mxu0 0.0
        %264 = vmatprep.subr.mxu0 0.0
        %v265 = vand.u32 %v228, 4294901760
        %266 = vmatpush1.msra.mxu0 %v265
        %267 = vmatprep.subr.mxu0 0.0
        %268 = vmatpush2.msra.mxu0 0.0
        %269 = vmatprep.subr.mxu0 0.0
        %270 = vmatpush2.msra.mxu0 0.0
        %271 = vmatprep.subr.mxu0 0.0
        %272 = vmatpush2.msra.mxu0 0.0
        %273 = vmatprep.subr.mxu0 0.0
        %274 = vmatpush2.msra.mxu0 0.0
        %275 = vmatprep.subr.mxu0 0.0
        %276 = vmatpush2.msra.mxu0 0.0
        %277 = vmatprep.subr.mxu0 0.0
        %278 = vmatpush2.msra.mxu0 0.0
        %279 = vmatprep.subr.mxu0 0.0
        %280 = vmatpush2.msra.mxu0 0.0
        %281 = vmatprep.subr.mxu0 0.0
        %282 = vmatpush2.msra.mxu0 0.0
        %283 = vmatprep.subr.mxu0 0.0
        %284 = vmatpush2.msra.mxu0 0.0
        %285 = vmatprep.subr.mxu0 0.0
        %286 = vmatpush2.msra.mxu0 0.0
        %287 = vmatprep.subr.mxu0 0.0
        %288 = vmatpush2.msra.mxu0 0.0
        %289 = vmatprep.subr.mxu0 0.0
        %290 = vmatpush2.msra.mxu0 0.0
        %291 = vmatprep.subr.mxu0 0.0
        %292 = vmatpush2.msra.mxu0 0.0
        %293 = vmatprep.subr.mxu0 0.0
        %294 = vmatpush2.msra.mxu0 0.0
        %295 = vmatprep.subr.mxu0 0.0
        %296 = vmatpush2.msra.mxu0 0.0
        %297 = vmatprep.subr.mxu0 0.0
        %298 = vmatpush2.msra.mxu0 0.0
        %299 = vmatprep.mubr.f32.mxu0 0.0
        %v300 = vand.u32 %v232, 4294901760
        %v301 = vsub.f32 %v232, %v300
        %v302 = vand.u32 %v301, 4294901760
        %v303 = vsub.f32 %v301, %v302
        %v304 = vand.u32 %v303, 4294901760
        %305 = vmatmul.mubr.f32.gmra.mxu0 %v304
        %v306 = vpop.f32.mrf.mxu0
        %v307 = vadd.f32 0.0, %v306
        %v308 = vpop.f32.mrf.mxu0
        %309 = vdwg.mxu0
        %310 = vmatprep.subr.mxu0 0.0
        %311 = vmatpush1.msra.mxu0 0.0
        %312 = vmatprep.subr.mxu0 0.0
        %313 = vmatpush1.msra.mxu0 0.0
        %314 = vmatprep.subr.mxu0 0.0
        %315 = vmatpush1.msra.mxu0 0.0
        %316 = vmatprep.subr.mxu0 0.0
        %317 = vmatpush1.msra.mxu0 0.0
        %318 = vmatprep.subr.mxu0 0.0
        %319 = vmatpush1.msra.mxu0 0.0
        %320 = vmatprep.subr.mxu0 0.0
        %321 = vmatpush1.msra.mxu0 0.0
        %322 = vmatprep.subr.mxu0 0.0
        %323 = vmatpush1.msra.mxu0 0.0
        %324 = vmatprep.subr.mxu0 0.0
        %325 = vmatpush1.msra.mxu0 0.0
        %326 = vmatprep.subr.mxu0 0.0
        %327 = vmatpush1.msra.mxu0 0.0
        %328 = vmatprep.subr.mxu0 0.0
        %329 = vmatpush1.msra.mxu0 0.0
        %330 = vmatprep.subr.mxu0 0.0
        %331 = vmatpush1.msra.mxu0 0.0
        %332 = vmatprep.subr.mxu0 0.0
        %333 = vmatpush1.msra.mxu0 0.0
        %334 = vmatprep.subr.mxu0 0.0
        %335 = vmatpush1.msra.mxu0 0.0
        %336 = vmatprep.subr.mxu0 0.0
        %337 = vmatpush1.msra.mxu0 0.0
        %338 = vmatprep.subr.mxu0 0.0
        %339 = vmatpush1.msra.mxu0 0.0
        %340 = vmatprep.subr.mxu0 0.0
        %v341 = vand.u32 %v228, 4294901760
        %v342 = vsub.f32 %v228, %v341
        %v343 = vand.u32 %v342, 4294901760
        %v344 = vsub.f32 %v342, %v343
        %v345 = vand.u32 %v344, 4294901760
        %346 = vmatpush1.msra.mxu0 %v345
        %347 = vmatprep.subr.mxu0 0.0
        %348 = vmatpush2.msra.mxu0 0.0
        %349 = vmatprep.subr.mxu0 0.0
        %350 = vmatpush2.msra.mxu0 0.0
        %351 = vmatprep.subr.mxu0 0.0
        %352 = vmatpush2.msra.mxu0 0.0
        %353 = vmatprep.subr.mxu0 0.0
        %354 = vmatpush2.msra.mxu0 0.0
        %355 = vmatprep.subr.mxu0 0.0
        %356 = vmatpush2.msra.mxu0 0.0
        %357 = vmatprep.subr.mxu0 0.0
        %358 = vmatpush2.msra.mxu0 0.0
        %359 = vmatprep.subr.mxu0 0.0
        %360 = vmatpush2.msra.mxu0 0.0
        %361 = vmatprep.subr.mxu0 0.0
        %362 = vmatpush2.msra.mxu0 0.0
        %363 = vmatprep.subr.mxu0 0.0
        %364 = vmatpush2.msra.mxu0 0.0
        %365 = vmatprep.subr.mxu0 0.0
        %366 = vmatpush2.msra.mxu0 0.0
        %367 = vmatprep.subr.mxu0 0.0
        %368 = vmatpush2.msra.mxu0 0.0
        %369 = vmatprep.subr.mxu0 0.0
        %370 = vmatpush2.msra.mxu0 0.0
        %371 = vmatprep.subr.mxu0 0.0
        %372 = vmatpush2.msra.mxu0 0.0
        %373 = vmatprep.subr.mxu0 0.0
        %374 = vmatpush2.msra.mxu0 0.0
        %375 = vmatprep.subr.mxu0 0.0
        %376 = vmatpush2.msra.mxu0 0.0
        %377 = vmatprep.subr.mxu0 0.0
        %378 = vmatpush2.msra.mxu0 0.0
        %379 = vmatprep.mubr.f32.mxu0 0.0
        %v380 = vand.u32 %v232, 4294901760
        %381 = vmatmul.mubr.f32.gmra.mxu0 %v380
        %v382 = vpop.f32.mrf.mxu0
        %v383 = vadd.f32 %v307, %v382
        %v384 = vpop.f32.mrf.mxu0
        %385 = vdwg.mxu0
        %386 = vmatprep.subr.mxu0 0.0
        %387 = vmatpush1.msra.mxu0 0.0
        %388 = vmatprep.subr.mxu0 0.0
        %389 = vmatpush1.msra.mxu0 0.0
        %390 = vmatprep.subr.mxu0 0.0
        %391 = vmatpush1.msra.mxu0 0.0
        %392 = vmatprep.subr.mxu0 0.0
        %393 = vmatpush1.msra.mxu0 0.0
        %394 = vmatprep.subr.mxu0 0.0
        %395 = vmatpush1.msra.mxu0 0.0
        %396 = vmatprep.subr.mxu0 0.0
        %397 = vmatpush1.msra.mxu0 0.0
        %398 = vmatprep.subr.mxu0 0.0
        %399 = vmatpush1.msra.mxu0 0.0
        %400 = vmatprep.subr.mxu0 0.0
        %401 = vmatpush1.msra.mxu0 0.0
        %402 = vmatprep.subr.mxu0 0.0
        %403 = vmatpush1.msra.mxu0 0.0
        %404 = vmatprep.subr.mxu0 0.0
        %405 = vmatpush1.msra.mxu0 0.0
        %406 = vmatprep.subr.mxu0 0.0
        %407 = vmatpush1.msra.mxu0 0.0
        %408 = vmatprep.subr.mxu0 0.0
        %409 = vmatpush1.msra.mxu0 0.0
        %410 = vmatprep.subr.mxu0 0.0
        %411 = vmatpush1.msra.mxu0 0.0
        %412 = vmatprep.subr.mxu0 0.0
        %413 = vmatpush1.msra.mxu0 0.0
        %414 = vmatprep.subr.mxu0 0.0
        %415 = vmatpush1.msra.mxu0 0.0
        %416 = vmatprep.subr.mxu0 0.0
        %v417 = vand.u32 %v228, 4294901760
        %v418 = vsub.f32 %v228, %v417
        %419 = vmatpush1.msra.mxu0 %v418
        %420 = vmatprep.subr.mxu0 0.0
        %421 = vmatpush2.msra.mxu0 0.0
        %422 = vmatprep.subr.mxu0 0.0
        %423 = vmatpush2.msra.mxu0 0.0
        %424 = vmatprep.subr.mxu0 0.0
        %425 = vmatpush2.msra.mxu0 0.0
        %426 = vmatprep.subr.mxu0 0.0
        %427 = vmatpush2.msra.mxu0 0.0
        %428 = vmatprep.subr.mxu0 0.0
        %429 = vmatpush2.msra.mxu0 0.0
        %430 = vmatprep.subr.mxu0 0.0
        %431 = vmatpush2.msra.mxu0 0.0
        %432 = vmatprep.subr.mxu0 0.0
        %433 = vmatpush2.msra.mxu0 0.0
        %434 = vmatprep.subr.mxu0 0.0
        %435 = vmatpush2.msra.mxu0 0.0
        %436 = vmatprep.subr.mxu0 0.0
        %437 = vmatpush2.msra.mxu0 0.0
        %438 = vmatprep.subr.mxu0 0.0
        %439 = vmatpush2.msra.mxu0 0.0
        %440 = vmatprep.subr.mxu0 0.0
        %441 = vmatpush2.msra.mxu0 0.0
        %442 = vmatprep.subr.mxu0 0.0
        %443 = vmatpush2.msra.mxu0 0.0
        %444 = vmatprep.subr.mxu0 0.0
        %445 = vmatpush2.msra.mxu0 0.0
        %446 = vmatprep.subr.mxu0 0.0
        %447 = vmatpush2.msra.mxu0 0.0
        %448 = vmatprep.subr.mxu0 0.0
        %449 = vmatpush2.msra.mxu0 0.0
        %450 = vmatprep.subr.mxu0 0.0
        %451 = vmatpush2.msra.mxu0 0.0
        %452 = vmatprep.mubr.f32.mxu0 0.0
        %v453 = vand.u32 %v232, 4294901760
        %v454 = vsub.f32 %v232, %v453
        %455 = vmatmul.mubr.f32.gmra.mxu0 %v454
        %v456 = vpop.f32.mrf.mxu0
        %v457 = vadd.f32 %v383, %v456
        %v458 = vpop.f32.mrf.mxu0
        %459 = vdwg.mxu0
        %460 = vmatprep.subr.mxu0 0.0
        %461 = vmatpush1.msra.mxu0 0.0
        %462 = vmatprep.subr.mxu0 0.0
        %463 = vmatpush1.msra.mxu0 0.0
        %464 = vmatprep.subr.mxu0 0.0
        %465 = vmatpush1.msra.mxu0 0.0
        %466 = vmatprep.subr.mxu0 0.0
        %467 = vmatpush1.msra.mxu0 0.0
        %468 = vmatprep.subr.mxu0 0.0
        %469 = vmatpush1.msra.mxu0 0.0
        %470 = vmatprep.subr.mxu0 0.0
        %471 = vmatpush1.msra.mxu0 0.0
        %472 = vmatprep.subr.mxu0 0.0
        %473 = vmatpush1.msra.mxu0 0.0
        %474 = vmatprep.subr.mxu0 0.0
        %475 = vmatpush1.msra.mxu0 0.0
        %476 = vmatprep.subr.mxu0 0.0
        %477 = vmatpush1.msra.mxu0 0.0
        %478 = vmatprep.subr.mxu0 0.0
        %479 = vmatpush1.msra.mxu0 0.0
        %480 = vmatprep.subr.mxu0 0.0
        %481 = vmatpush1.msra.mxu0 0.0
        %482 = vmatprep.subr.mxu0 0.0
        %483 = vmatpush1.msra.mxu0 0.0
        %484 = vmatprep.subr.mxu0 0.0
        %485 = vmatpush1.msra.mxu0 0.0
        %486 = vmatprep.subr.mxu0 0.0
        %487 = vmatpush1.msra.mxu0 0.0
        %488 = vmatprep.subr.mxu0 0.0
        %489 = vmatpush1.msra.mxu0 0.0
        %490 = vmatprep.subr.mxu0 0.0
        %v491 = vand.u32 %v228, 4294901760
        %492 = vmatpush1.msra.mxu0 %v491
        %493 = vmatprep.subr.mxu0 0.0
        %494 = vmatpush2.msra.mxu0 0.0
        %495 = vmatprep.subr.mxu0 0.0
        %496 = vmatpush2.msra.mxu0 0.0
        %497 = vmatprep.subr.mxu0 0.0
        %498 = vmatpush2.msra.mxu0 0.0
        %499 = vmatprep.subr.mxu0 0.0
        %500 = vmatpush2.msra.mxu0 0.0
        %501 = vmatprep.subr.mxu0 0.0
        %502 = vmatpush2.msra.mxu0 0.0
        %503 = vmatprep.subr.mxu0 0.0
        %504 = vmatpush2.msra.mxu0 0.0
        %505 = vmatprep.subr.mxu0 0.0
        %506 = vmatpush2.msra.mxu0 0.0
        %507 = vmatprep.subr.mxu0 0.0
        %508 = vmatpush2.msra.mxu0 0.0
        %509 = vmatprep.subr.mxu0 0.0
        %510 = vmatpush2.msra.mxu0 0.0
        %511 = vmatprep.subr.mxu0 0.0
        %512 = vmatpush2.msra.mxu0 0.0
        %513 = vmatprep.subr.mxu0 0.0
        %514 = vmatpush2.msra.mxu0 0.0
        %515 = vmatprep.subr.mxu0 0.0
        %516 = vmatpush2.msra.mxu0 0.0
        %517 = vmatprep.subr.mxu0 0.0
        %518 = vmatpush2.msra.mxu0 0.0
        %519 = vmatprep.subr.mxu0 0.0
        %520 = vmatpush2.msra.mxu0 0.0
        %521 = vmatprep.subr.mxu0 0.0
        %522 = vmatpush2.msra.mxu0 0.0
        %523 = vmatprep.subr.mxu0 0.0
        %524 = vmatpush2.msra.mxu0 0.0
        %525 = vmatprep.mubr.f32.mxu0 0.0
        %v526 = vand.u32 %v232, 4294901760
        %v527 = vsub.f32 %v232, %v526
        %v528 = vand.u32 %v527, 4294901760
        %529 = vmatmul.mubr.f32.gmra.mxu0 %v528
        %v530 = vpop.f32.mrf.mxu0
        %v531 = vadd.f32 %v457, %v530
        %v532 = vpop.f32.mrf.mxu0
        %533 = vdwg.mxu0
        %534 = vmatprep.subr.mxu0 0.0
        %535 = vmatpush1.msra.mxu0 0.0
        %536 = vmatprep.subr.mxu0 0.0
        %537 = vmatpush1.msra.mxu0 0.0
        %538 = vmatprep.subr.mxu0 0.0
        %539 = vmatpush1.msra.mxu0 0.0
        %540 = vmatprep.subr.mxu0 0.0
        %541 = vmatpush1.msra.mxu0 0.0
        %542 = vmatprep.subr.mxu0 0.0
        %543 = vmatpush1.msra.mxu0 0.0
        %544 = vmatprep.subr.mxu0 0.0
        %545 = vmatpush1.msra.mxu0 0.0
        %546 = vmatprep.subr.mxu0 0.0
        %547 = vmatpush1.msra.mxu0 0.0
        %548 = vmatprep.subr.mxu0 0.0
        %549 = vmatpush1.msra.mxu0 0.0
        %550 = vmatprep.subr.mxu0 0.0
        %551 = vmatpush1.msra.mxu0 0.0
        %552 = vmatprep.subr.mxu0 0.0
        %553 = vmatpush1.msra.mxu0 0.0
        %554 = vmatprep.subr.mxu0 0.0
        %555 = vmatpush1.msra.mxu0 0.0
        %556 = vmatprep.subr.mxu0 0.0
        %557 = vmatpush1.msra.mxu0 0.0
        %558 = vmatprep.subr.mxu0 0.0
        %559 = vmatpush1.msra.mxu0 0.0
        %560 = vmatprep.subr.mxu0 0.0
        %561 = vmatpush1.msra.mxu0 0.0
        %562 = vmatprep.subr.mxu0 0.0
        %563 = vmatpush1.msra.mxu0 0.0
        %564 = vmatprep.subr.mxu0 0.0
        %v565 = vand.u32 %v228, 4294901760
        %v566 = vsub.f32 %v228, %v565
        %v567 = vand.u32 %v566, 4294901760
        %568 = vmatpush1.msra.mxu0 %v567
        %569 = vmatprep.subr.mxu0 0.0
        %570 = vmatpush2.msra.mxu0 0.0
        %571 = vmatprep.subr.mxu0 0.0
        %572 = vmatpush2.msra.mxu0 0.0
        %573 = vmatprep.subr.mxu0 0.0
        %574 = vmatpush2.msra.mxu0 0.0
        %575 = vmatprep.subr.mxu0 0.0
        %576 = vmatpush2.msra.mxu0 0.0
        %577 = vmatprep.subr.mxu0 0.0
        %578 = vmatpush2.msra.mxu0 0.0
        %579 = vmatprep.subr.mxu0 0.0
        %580 = vmatpush2.msra.mxu0 0.0
        %581 = vmatprep.subr.mxu0 0.0
        %582 = vmatpush2.msra.mxu0 0.0
        %583 = vmatprep.subr.mxu0 0.0
        %584 = vmatpush2.msra.mxu0 0.0
        %585 = vmatprep.subr.mxu0 0.0
        %586 = vmatpush2.msra.mxu0 0.0
        %587 = vmatprep.subr.mxu0 0.0
        %588 = vmatpush2.msra.mxu0 0.0
        %589 = vmatprep.subr.mxu0 0.0
        %590 = vmatpush2.msra.mxu0 0.0
        %591 = vmatprep.subr.mxu0 0.0
        %592 = vmatpush2.msra.mxu0 0.0
        %593 = vmatprep.subr.mxu0 0.0
        %594 = vmatpush2.msra.mxu0 0.0
        %595 = vmatprep.subr.mxu0 0.0
        %596 = vmatpush2.msra.mxu0 0.0
        %597 = vmatprep.subr.mxu0 0.0
        %598 = vmatpush2.msra.mxu0 0.0
        %599 = vmatprep.subr.mxu0 0.0
        %600 = vmatpush2.msra.mxu0 0.0
        %601 = vmatprep.mubr.f32.mxu0 0.0
        %v602 = vand.u32 %v232, 4294901760
        %603 = vmatmul.mubr.f32.gmra.mxu0 %v602
        %v604 = vpop.f32.mrf.mxu0
        %v605 = vadd.f32 %v531, %v604
        %v606 = vpop.f32.mrf.mxu0
        %607 = vdwg.mxu0
        %608 = vmatprep.subr.mxu0 0.0
        %609 = vmatpush1.msra.mxu0 0.0
        %610 = vmatprep.subr.mxu0 0.0
        %611 = vmatpush1.msra.mxu0 0.0
        %612 = vmatprep.subr.mxu0 0.0
        %613 = vmatpush1.msra.mxu0 0.0
        %614 = vmatprep.subr.mxu0 0.0
        %615 = vmatpush1.msra.mxu0 0.0
        %616 = vmatprep.subr.mxu0 0.0
        %617 = vmatpush1.msra.mxu0 0.0
        %618 = vmatprep.subr.mxu0 0.0
        %619 = vmatpush1.msra.mxu0 0.0
        %620 = vmatprep.subr.mxu0 0.0
        %621 = vmatpush1.msra.mxu0 0.0
        %622 = vmatprep.subr.mxu0 0.0
        %623 = vmatpush1.msra.mxu0 0.0
        %624 = vmatprep.subr.mxu0 0.0
        %625 = vmatpush1.msra.mxu0 0.0
        %626 = vmatprep.subr.mxu0 0.0
        %627 = vmatpush1.msra.mxu0 0.0
        %628 = vmatprep.subr.mxu0 0.0
        %629 = vmatpush1.msra.mxu0 0.0
        %630 = vmatprep.subr.mxu0 0.0
        %631 = vmatpush1.msra.mxu0 0.0
        %632 = vmatprep.subr.mxu0 0.0
        %633 = vmatpush1.msra.mxu0 0.0
        %634 = vmatprep.subr.mxu0 0.0
        %635 = vmatpush1.msra.mxu0 0.0
        %636 = vmatprep.subr.mxu0 0.0
        %637 = vmatpush1.msra.mxu0 0.0
        %638 = vmatprep.subr.mxu0 0.0
        %v639 = vand.u32 %v228, 4294901760
        %640 = vmatpush1.msra.mxu0 %v639
        %641 = vmatprep.subr.mxu0 0.0
        %642 = vmatpush2.msra.mxu0 0.0
        %643 = vmatprep.subr.mxu0 0.0
        %644 = vmatpush2.msra.mxu0 0.0
        %645 = vmatprep.subr.mxu0 0.0
        %646 = vmatpush2.msra.mxu0 0.0
        %647 = vmatprep.subr.mxu0 0.0
        %648 = vmatpush2.msra.mxu0 0.0
        %649 = vmatprep.subr.mxu0 0.0
        %650 = vmatpush2.msra.mxu0 0.0
        %651 = vmatprep.subr.mxu0 0.0
        %652 = vmatpush2.msra.mxu0 0.0
        %653 = vmatprep.subr.mxu0 0.0
        %654 = vmatpush2.msra.mxu0 0.0
        %655 = vmatprep.subr.mxu0 0.0
        %656 = vmatpush2.msra.mxu0 0.0
        %657 = vmatprep.subr.mxu0 0.0
        %658 = vmatpush2.msra.mxu0 0.0
        %659 = vmatprep.subr.mxu0 0.0
        %660 = vmatpush2.msra.mxu0 0.0
        %661 = vmatprep.subr.mxu0 0.0
        %662 = vmatpush2.msra.mxu0 0.0
        %663 = vmatprep.subr.mxu0 0.0
        %664 = vmatpush2.msra.mxu0 0.0
        %665 = vmatprep.subr.mxu0 0.0
        %666 = vmatpush2.msra.mxu0 0.0
        %667 = vmatprep.subr.mxu0 0.0
        %668 = vmatpush2.msra.mxu0 0.0
        %669 = vmatprep.subr.mxu0 0.0
        %670 = vmatpush2.msra.mxu0 0.0
        %671 = vmatprep.subr.mxu0 0.0
        %672 = vmatpush2.msra.mxu0 0.0
        %673 = vmatprep.mubr.f32.mxu0 0.0
        %v674 = vand.u32 %v232, 4294901760
        %675 = vmatmul.mubr.f32.gmra.mxu0 %v674
        %v676 = vpop.f32.mrf.mxu0
        %v677 = vadd.f32 %v605, %v676
        %v678 = vpop.f32.mrf.mxu0
        %679 = vdwg.mxu0
        %v680 = vadd.f32 %v229, %v677
        %vm681 = vcmask 253952
        %682 = vst.msk [vmem:[%s208] sm:$0x1] %vm681, %v680
        %s683 = sand.u32 %s108, 1
        %s684 = scalar_lea.sflag [#allocation4], %s683
        %s685 = sand.u32 %s108, 1
        %s686 = scalar_lea.vmem [#allocation5], %s685
        // Predicated region
        $region37: #{tpu_custom_call.1} parent=27 // pred_check
          %p687 = pneg %p118
        $region38: #{tpu_custom_call.1} parent=27 // pred_check_branch
          %689 = sbr.rel (%p687) target = $region40
        $region39: #{tpu_custom_call.1} parent=27 // pred_region
          %s690 = sadd.s32 %s24, %s25
          %s692 = ssub.s32 16, 16
          %693 = vsyncadd %s684, %s692
          %s694 = smul.addr %s690, 16
          %s695 = scalar_lea.hbm %s2, %s694
          %s697 = sshll.u32 %s686, 4
          %s698 = int_to_ptr.vmem [resolvable:$true] %s697
          %700 = dma.vmem_to_hbm [thread:$0]  %s698, 16, %s695, %s684
        $region40: #{tpu_custom_call.1} parent=27 // pred_fallthru
          _
      $region28: #{tpu_custom_call.1} parent=5 // pred_fallthru
        _
      %p701 = scmp.le.s32.totalorder 2, %s14
      // Predicated region
      $region41: #{tpu_custom_call.1} parent=5 // pred_check
        %p702 = pneg %p701
      $region42: #{tpu_custom_call.1} parent=5 // pred_check_branch
        %704 = sbr.rel (%p702) target = $region44
      $region43: #{tpu_custom_call.1} parent=5 // pred_region
        %s705 = ssub.s32 %s14, 2
        // Predicated region
        $region45: #{tpu_custom_call.1} parent=43 // pred_check
          %p706 = pneg %p124
        $region46: #{tpu_custom_call.1} parent=43 // pred_check_branch
          %708 = sbr.rel (%p706) target = $region48
        $region47: #{tpu_custom_call.1} parent=43 // pred_region
          %s709 = sand.u32 %s109, 1
          %s710 = scalar_lea.sflag [#allocation4], %s709
          %s711 = sand.u32 %s109, 1
          %s712 = scalar_lea.vmem [#allocation5], %s711
          %713 = dma.done %s710, 16
        $region48: #{tpu_custom_call.1} parent=43 // pred_fallthru
          _
      $region44: #{tpu_custom_call.1} parent=5 // pred_fallthru
        _
    $region6: #{tpu_custom_call.1} parent=1 // loop_footer
      %s18 = sadd.s32 1, %s14
    $region7: #{tpu_custom_call.1} parent=1 // loop_footer_branch
      %13 = sbr.rel target = $region3
    $region8: #{tpu_custom_call.1} parent=1 // loop_exit
      _
    %714 = vsyncpa [#allocation3], 1
    %s715 = scalar_lea.sflag [#allocation3], 1
    %716 = vsyncpa %s715, 1
    %717 = vsyncpa [#allocation4], 1
    %s718 = scalar_lea.sflag [#allocation4], 1
    %719 = vsyncpa %s718, 1

</llo_original>
